<compile_context>
chip_gen: v5e
topology: v5e:2x2
jax: 0.10.0
libtpu: 0.0.40
codegen_flags: <defaults>
</compile_context>

<pallas_src>
import jax
import jax.numpy as jnp
from jax.experimental import pallas as pl
from jax.experimental.pallas import tpu as pltpu

EPS = 1e-5  # nn.LayerNorm default


def _layernorm_f32(x, gamma, beta):
    mean = jnp.mean(x, axis=-1, keepdims=True)
    centered = x - mean
    var = jnp.mean(centered * centered, axis=-1, keepdims=True)
    return centered * jax.lax.rsqrt(var + EPS) * gamma + beta


def _resid_kernel_resident(x_ref, w_ref, b_ref, g_ref, be_ref, o_ref):
    """1-D grid over row blocks; full bf16 weight is VMEM-resident."""
    x = x_ref[...].astype(jnp.float32)
    xn = _layernorm_f32(x, g_ref[...], be_ref[...])
    # y = xn @ W^T with W in PyTorch (out, in) layout: contract on dim 1 of W.
    y = jax.lax.dot_general(
        xn.astype(jnp.bfloat16), w_ref[...],
        dimension_numbers=(((1,), (1,)), ((), ())),
        preferred_element_type=jnp.float32)
    o_ref[...] = (x + y + b_ref[...]).astype(o_ref.dtype)


def _resid_kernel_coltiled(x_ref, w_ref, b_ref, g_ref, be_ref, o_ref, xn_ref):
    """2-D grid (row blocks, weight-column blocks); column axis is innermost.

    The full-width x row block is DMA'd once per row block (its block index is
    constant along j), LayerNorm'd once into a bf16 scratch, and the residual
    column slice is read straight out of the resident VMEM block.
    """
    j = pl.program_id(1)

    @pl.when(j == 0)
    def _():
        x = x_ref[...].astype(jnp.float32)
        xn_ref[...] = _layernorm_f32(x, g_ref[...], be_ref[...]).astype(xn_ref.dtype)

    col_tile = o_ref.shape[-1]
    y = jax.lax.dot_general(
        xn_ref[...], w_ref[...],
        dimension_numbers=(((1,), (1,)), ((), ())),
        preferred_element_type=jnp.float32)
    c0 = pl.multiple_of(j * col_tile, col_tile)
    x_cols = x_ref[:, pl.ds(c0, col_tile)].astype(jnp.float32)
    o_ref[...] = (x_cols + y + b_ref[...]).astype(o_ref.dtype)


def _pick_row_tile(rows, requested):
    t = min(requested, rows)
    if rows % t == 0 and (t % 8 == 0 or t == rows):
        return t
    # Largest 8-aligned divisor of rows not exceeding the request.
    start = (t // 8) * 8
    for cand in range(start, 7, -8):
        if rows % cand == 0:
            return cand
    return rows


def simple_residual_connection(x, weight, bias, gamma, beta, *,
                               row_tile=256, col_tile=None):
    """x: (B, S, H) f32. weight: (H, H) PyTorch-style (out, in). bias/gamma/beta: (H,)."""
    B, S, H = x.shape
    rows = B * S

    row_tile = _pick_row_tile(rows, row_tile)

    if col_tile is None:
        # Keep the bf16 weight fully resident when small (<= 8 MiB fits even
        # v5e's 16 MiB default scoped VMEM); stream 512-wide column blocks for
        # transformer-scale H (bounds VMEM on v7x's 64 MiB).
        col_tile = H if (H * H * 2) <= (8 << 20) else 512
    col_tile = min(col_tile, H)
    assert H % col_tile == 0
    assert col_tile == H or col_tile % 128 == 0, "lane dim must be 128-aligned"

    x2 = x.reshape(rows, H)
    w_bf = weight.astype(jnp.bfloat16)          # bf16 MXU operand, halves W DMA bytes
    b2 = bias.reshape(1, H).astype(jnp.float32)
    g2 = gamma.reshape(1, H).astype(jnp.float32)
    be2 = beta.reshape(1, H).astype(jnp.float32)

    cost = pl.CostEstimate(
        flops=2 * rows * H * H,
        transcendentals=rows,                    # one rsqrt per row
        bytes_accessed=2 * rows * H * 4 + H * H * 2 + 3 * H * 4,
    )

    if col_tile == H:
        grid = (rows // row_tile,)
        in_specs = [
            pl.BlockSpec((row_tile, H), lambda i: (i, 0)),   # x row block
            pl.BlockSpec((H, H), lambda i: (0, 0)),          # W (resident, DMA'd once)
            pl.BlockSpec((1, H), lambda i: (0, 0)),          # bias
            pl.BlockSpec((1, H), lambda i: (0, 0)),          # gamma
            pl.BlockSpec((1, H), lambda i: (0, 0)),          # beta
        ]
        out_specs = pl.BlockSpec((row_tile, H), lambda i: (i, 0))
        scratch_shapes = []
        kernel = _resid_kernel_resident
        operands = (x2, w_bf, b2, g2, be2)
        dim_sem = ("parallel",)
        vmem_need = (2 * (row_tile * H * 4 + row_tile * H * 4)   # x/out double buffers
                     + H * H * 2 + 3 * H * 4)
    else:
        grid = (rows // row_tile, H // col_tile)
        in_specs = [
            pl.BlockSpec((row_tile, H), lambda i, j: (i, 0)),         # x full rows
            pl.BlockSpec((col_tile, H), lambda i, j: (j, 0)),         # W column block
            pl.BlockSpec((1, col_tile), lambda i, j: (0, j)),         # bias cols
            pl.BlockSpec((1, H), lambda i, j: (0, 0)),                # gamma
            pl.BlockSpec((1, H), lambda i, j: (0, 0)),                # beta
        ]
        out_specs = pl.BlockSpec((row_tile, col_tile), lambda i, j: (i, j))
        scratch_shapes = [pltpu.VMEM((row_tile, H), jnp.bfloat16)]    # xn (bf16)
        kernel = _resid_kernel_coltiled
        operands = (x2, w_bf, b2, g2, be2)
        # Column axis must stay sequential on one core (xn scratch + resident
        # x rows carry across it); the row axis shards across TensorCores.
        dim_sem = ("parallel", "arbitrary")
        vmem_need = (2 * (row_tile * H * 4                # x rows double buffer
                          + col_tile * H * 2              # W col block double buffer
                          + row_tile * col_tile * 4)      # out double buffer
                     + row_tile * H * 2 + 3 * H * 4)      # xn scratch + params

    vmem_limit = int(min(64 << 20, max(vmem_need + (4 << 20), 16 << 20)))

    out = pl.pallas_call(
        kernel,
        out_shape=jax.ShapeDtypeStruct((rows, H), x.dtype),
        grid_spec=pltpu.PrefetchScalarGridSpec(
            num_scalar_prefetch=0,
            grid=grid,
            in_specs=in_specs,
            out_specs=out_specs,
            scratch_shapes=scratch_shapes,
        ),
        compiler_params=pltpu.CompilerParams(
            dimension_semantics=dim_sem,
            vmem_limit_bytes=vmem_limit,
        ),
        cost_estimate=cost,
    )(*operands)
    return out.reshape(B, S, H)


def _reference(x, weight, bias, gamma, beta):
    mean = jnp.mean(x, axis=-1, keepdims=True)
    var = jnp.mean((x - mean) ** 2, axis=-1, keepdims=True)
    xn = (x - mean) / jnp.sqrt(var + EPS) * gamma + beta
    y = jnp.einsum("bsh,oh->bso", xn, weight) + bias
    return x + y


def _make_inputs(key, B, S, H):
    kx, kw, kb = jax.random.split(key, 3)
    x = jax.random.normal(kx, (B, S, H), dtype=jnp.float32)
    bound = 1.0 / (H ** 0.5)
    weight = jax.random.uniform(kw, (H, H), jnp.float32, -bound, bound)  # (out, in)
    bias = jax.random.uniform(kb, (H,), jnp.float32, -bound, bound)
    gamma = jnp.ones((H,), jnp.float32)   # nn.LayerNorm default init
    beta = jnp.zeros((H,), jnp.float32)
    return x, weight, bias, gamma, beta


if __name__ == "__main__":
    k1, k2 = jax.random.split(jax.random.PRNGKey(0))
    # bf16 MXU operands => compare against the f32 reference with bf16-level tolerance.
    TOL = dict(atol=3e-2, rtol=3e-2)

    # Case 1: resident-weight path (1-D grid, two row blocks).
    x, w, b, g, be = _make_inputs(k1, 2, 256, 128)
    out = jax.block_until_ready(simple_residual_connection(x, w, b, g, be))
    ref = _reference(x, w, b, g, be)
    assert out.shape == x.shape
    assert jnp.allclose(out, ref, **TOL), float(jnp.max(jnp.abs(out - ref)))

    # Case 2: force weight column tiling (exercises the j > 0 scratch-reuse path
    # and the in-VMEM residual slice).
    x, w, b, g, be = _make_inputs(k2, 1, 256, 256)
    out = jax.block_until_ready(
        simple_residual_connection(x, w, b, g, be, col_tile=128))
    ref = _reference(x, w, b, g, be)
    assert out.shape == x.shape
    assert jnp.allclose(out, ref, **TOL), float(jnp.max(jnp.abs(out - ref)))

    print("KERNEL_OK")
</pallas_src>

<mosaic_0001>
module attributes {stable_mosaic.version = 11 : i64} {
  func.func @_resid_kernel_resident(%arg0: i32, %arg1: memref<256x128xf32, #tpu.memory_space<vmem>>, %arg2: memref<128x128xbf16, #tpu.memory_space<vmem>>, %arg3: memref<1x128xf32, #tpu.memory_space<vmem>>, %arg4: memref<1x128xf32, #tpu.memory_space<vmem>>, %arg5: memref<1x128xf32, #tpu.memory_space<vmem>>, %arg6: memref<256x128xf32, #tpu.memory_space<vmem>>) attributes {dimension_semantics = [#tpu.dimension_semantics<parallel>], iteration_bounds = array<i64: 2>, scalar_prefetch = 0 : i64, scratch_operands = 0 : i64, tpu.core_type = #tpu.core_type<tc>, window_params = [{transform_indices = @transform_0, window_bounds = array<i64: 256, 128>}, {pipeline_mode = #tpu.pipeline_mode<synchronous>, transform_indices = @transform_1, window_bounds = array<i64: 128, 128>}, {pipeline_mode = #tpu.pipeline_mode<synchronous>, transform_indices = @transform_2, window_bounds = array<i64: 1, 128>}, {pipeline_mode = #tpu.pipeline_mode<synchronous>, transform_indices = @transform_3, window_bounds = array<i64: 1, 128>}, {pipeline_mode = #tpu.pipeline_mode<synchronous>, transform_indices = @transform_4, window_bounds = array<i64: 1, 128>}, {transform_indices = @transform_5, window_bounds = array<i64: 256, 128>}]} {
    %c0 = arith.constant 0 : index
    %c0_0 = arith.constant 0 : index
    %0 = vector.load %arg1[%c0, %c0_0] : memref<256x128xf32, #tpu.memory_space<vmem>>, vector<256x128xf32>
    %c0_1 = arith.constant 0 : index
    %c0_2 = arith.constant 0 : index
    %1 = vector.load %arg4[%c0_1, %c0_2] : memref<1x128xf32, #tpu.memory_space<vmem>>, vector<1x128xf32>
    %c0_3 = arith.constant 0 : index
    %c0_4 = arith.constant 0 : index
    %2 = vector.load %arg5[%c0_3, %c0_4] : memref<1x128xf32, #tpu.memory_space<vmem>>, vector<1x128xf32>
    %cst = arith.constant dense<0.000000e+00> : vector<256xf32>
    %3 = vector.multi_reduction <add>, %0, %cst [1] : vector<256x128xf32> to vector<256xf32>
    %4 = vector.shape_cast %3 : vector<256xf32> to vector<256x1xf32>
    %cst_5 = arith.constant 1.280000e+02 : f32
    %5 = vector.broadcast %cst_5 : f32 to vector<256x1xf32>
    %6 = arith.divf %4, %5 : vector<256x1xf32>
    %7 = vector.broadcast %6 : vector<256x1xf32> to vector<256x128xf32>
    %8 = arith.subf %0, %7 : vector<256x128xf32>
    %9 = arith.mulf %8, %8 : vector<256x128xf32>
    %cst_6 = arith.constant dense<0.000000e+00> : vector<256xf32>
    %10 = vector.multi_reduction <add>, %9, %cst_6 [1] : vector<256x128xf32> to vector<256xf32>
    %11 = vector.shape_cast %10 : vector<256xf32> to vector<256x1xf32>
    %cst_7 = arith.constant 1.280000e+02 : f32
    %12 = vector.broadcast %cst_7 : f32 to vector<256x1xf32>
    %13 = arith.divf %11, %12 : vector<256x1xf32>
    %cst_8 = arith.constant 9.99999974E-6 : f32
    %14 = vector.broadcast %cst_8 : f32 to vector<256x1xf32>
    %15 = arith.addf %13, %14 : vector<256x1xf32>
    %16 = math.rsqrt %15 : vector<256x1xf32>
    %17 = vector.broadcast %16 : vector<256x1xf32> to vector<256x128xf32>
    %18 = arith.mulf %8, %17 : vector<256x128xf32>
    %19 = vector.broadcast %1 : vector<1x128xf32> to vector<256x128xf32>
    %20 = arith.mulf %18, %19 : vector<256x128xf32>
    %21 = vector.broadcast %2 : vector<1x128xf32> to vector<256x128xf32>
    %22 = arith.addf %20, %21 : vector<256x128xf32>
    %23 = arith.truncf %22 : vector<256x128xf32> to vector<256x128xbf16>
    %c0_9 = arith.constant 0 : index
    %c0_10 = arith.constant 0 : index
    %24 = vector.load %arg2[%c0_9, %c0_10] : memref<128x128xbf16, #tpu.memory_space<vmem>>, vector<128x128xbf16>
    %cst_11 = arith.constant dense<0.000000e+00> : vector<256x128xf32>
    %25 = tpu.matmul %23, %24, %cst_11 {dimension_numbers = #tpu.dot_dimension_numbers<[1], [1], [0], [0], [0, 0, 1, 0], [], []>} : vector<256x128xbf16>, vector<128x128xbf16>, vector<256x128xf32> -> vector<256x128xf32>
    %26 = arith.addf %0, %25 : vector<256x128xf32>
    %c0_12 = arith.constant 0 : index
    %c0_13 = arith.constant 0 : index
    %27 = vector.load %arg3[%c0_12, %c0_13] : memref<1x128xf32, #tpu.memory_space<vmem>>, vector<1x128xf32>
    %28 = vector.broadcast %27 : vector<1x128xf32> to vector<256x128xf32>
    %29 = arith.addf %26, %28 : vector<256x128xf32>
    %c0_14 = arith.constant 0 : index
    %c0_15 = arith.constant 0 : index
    %30 = vector.load %arg6[%c0_14, %c0_15] : memref<256x128xf32, #tpu.memory_space<vmem>>, vector<256x128xf32>
    tpu.vector_store %arg6[%c0_14, %c0_15], %29 {strides = array<i32>} : memref<256x128xf32, #tpu.memory_space<vmem>>, vector<256x128xf32>,
    return
  }
  func.func @transform_0(%arg0: i32) -> (i32, i32) {
    %c0_i32 = arith.constant 0 : i32
    %c0_i32_0 = arith.constant 0 : i32
    return %arg0, %c0_i32 : i32, i32
  }
  func.func @transform_1(%arg0: i32) -> (i32, i32) {
    %c0_i32 = arith.constant 0 : i32
    %c0_i32_0 = arith.constant 0 : i32
    %c0_i32_1 = arith.constant 0 : i32
    return %c0_i32, %c0_i32_0 : i32, i32
  }
  func.func @transform_2(%arg0: i32) -> (i32, i32) {
    %c0_i32 = arith.constant 0 : i32
    %c0_i32_0 = arith.constant 0 : i32
    %c0_i32_1 = arith.constant 0 : i32
    return %c0_i32, %c0_i32_0 : i32, i32
  }
  func.func @transform_3(%arg0: i32) -> (i32, i32) {
    %c0_i32 = arith.constant 0 : i32
    %c0_i32_0 = arith.constant 0 : i32
    %c0_i32_1 = arith.constant 0 : i32
    return %c0_i32, %c0_i32_0 : i32, i32
  }
  func.func @transform_4(%arg0: i32) -> (i32, i32) {
    %c0_i32 = arith.constant 0 : i32
    %c0_i32_0 = arith.constant 0 : i32
    %c0_i32_1 = arith.constant 0 : i32
    return %c0_i32, %c0_i32_0 : i32, i32
  }
  func.func @transform_5(%arg0: i32) -> (i32, i32) {
    %c0_i32 = arith.constant 0 : i32
    %c0_i32_0 = arith.constant 0 : i32
    return %arg0, %c0_i32 : i32, i32
  }
}

</mosaic_0001>

<llo_original>
// kernel: tpu_custom_call.1
$region0: #{tpu_custom_call.1}
  #allocation0 [shape = 'u32[]', space=smem, size = 0x4, offset = 0x4, fixed_abs, tag = 'smem constant byte address 0x4 - core index']
  #allocation1 [shape = 'u32[72,128]{1,0:T(1,128)}', space=vmem, size = 0x9000, scoped, tag = 'internal scratch']
  %s0 = inlined_call_operand.hbm [shape: f32[512,128], index: 0, kind: input, shape index: {}]
  %s1 = inlined_call_operand.hbm [shape: bf16[128,128], index: 1, kind: input, shape index: {}]
  %s2 = inlined_call_operand.vmem [shape: f32[1,128], index: 2, kind: input, shape index: {}]
  %s3 = inlined_call_operand.vmem [shape: f32[1,128], index: 3, kind: input, shape index: {}]
  %s4 = inlined_call_operand.vmem [shape: f32[1,128], index: 4, kind: input, shape index: {}]
  %s5 = inlined_call_operand.hbm [shape: f32[512,128], index: 5, kind: output, shape index: {}]
  %s6 = sld [smem:[#allocation0]]
  $region61: #{tpu_custom_call.1} parent=0
    _
  %s8 = ssub.s32 1, %s6
  %s9 = scalar_select 0, %s8, %s6
  $region1: #{tpu_custom_call.1} parent=0
    #allocation2 [shape = 'u8[262144]{0}', space=vmem, size = 0x40000, scoped, tag = 'input window, operand 0']
    #allocation3 [shape = 's32[2]{0}', space=sflag, size = 0x8, scoped, tag = 'scoped memory for tpu_custom_call.1']
    #allocation4 [shape = 's32[2]{0}', space=sflag, size = 0x8, scoped, tag = 'scoped memory for tpu_custom_call.1']
    #allocation5 [shape = 'u8[32768]{0}', space=vmem, size = 0x8000, scoped, tag = 'input window, operand 1, single buffered']
    #allocation6 [shape = 's32[1]{0}', space=sflag, size = 0x4, scoped, tag = 'scoped memory for tpu_custom_call.1']
    #allocation7 [shape = 'u8[262144]{0}', space=vmem, size = 0x40000, scoped, tag = 'output window, operand 0']
    %10 = vsyncpa [#allocation3], 0
    %s11 = scalar_lea.sflag [#allocation3], 1
    %12 = vsyncpa %s11, 0
    %13 = vsyncpa [#allocation6], 0
    %14 = vsyncpa [#allocation4], 0
    %s15 = scalar_lea.sflag [#allocation4], 1
    %16 = vsyncpa %s15, 0
    loop: start=0, step=1, limit=4
    $region2: #{tpu_custom_call.1} parent=1 // loop_pre_header
      _
    $region3: #{tpu_custom_call.1} parent=1 // loop_header
      %s18 = sphi 0, %s22
      %p19 = scmp.ge.s32.totalorder %s18, 4
      %s28 = sphi 0, %s30
      %s31 = sphi 0, %s28
      %s32 = sphi 0, %s31
      %s48 = sphi 0, %s32
      %s52 = sphi 0, %s52
      %s54 = sphi 0, %s52
      %s55 = sphi 0, %s54
      %s69 = sphi 0, %s55
      %s73 = sphi 0, %s73
      %s75 = sphi 0, %s73
      %s76 = sphi 0, %s75
      %s90 = sphi 0, %s76
      %s94 = sphi 0, %s94
      %s96 = sphi 0, %s94
      %s97 = sphi 0, %s96
      %s111 = sphi 0, %s97
      %s115 = sphi 0, %s115
      %s117 = sphi 0, %s115
      %s118 = sphi 0, %s117
      %s132 = sphi 0, %s118
      %s138 = sphi 0, %s140
      %s141 = sphi 0, %s138
      %s142 = sphi 0, %s141
      %s158 = sphi 0, %s142
    $region4: #{tpu_custom_call.1} parent=1 // loop_header_branch
      %21 = sbr.rel (%p19) target = $region8
    $region5: #{tpu_custom_call.1} parent=1 // loop_body
      %s23 = ssub.s32 %s18, 1
      %s24 = ssub.s32 %s18, 2
      %s25 = sadd.s32 %s18, 1
      %s26 = ssub.s32 %s18, %s25
      %p27 = scmp.eq.s32.totalorder %s26, 0
      %s29 = sadd.s32 %s28, 1
      %s30 = scalar_select %p27, %s28, %s29
      %p33 = pneg %p27
      %p34 = scmp.eq.s32.totalorder %s18, 1
      %p35 = por %p33, %p34
      %p36 = scmp.ne.s32.totalorder %s28, %s31
      %p37 = scmp.eq.s32.totalorder %s18, 0
      %p38 = por %p36, %p37
      %p39 = scmp.ne.s32.totalorder %s28, %s31
      %p40 = scmp.eq.s32.totalorder %s23, 1
      %p41 = por %p39, %p40
      %p42 = scmp.ne.s32.totalorder %s31, %s32
      %p43 = scmp.eq.s32.totalorder %s23, 0
      %p44 = por %p42, %p43
      %p45 = scmp.ne.s32.totalorder %s31, %s32
      %p46 = scmp.eq.s32.totalorder %s24, 1
      %p47 = por %p45, %p46
      %p49 = scmp.ne.s32.totalorder %s32, %s48
      %p50 = scmp.eq.s32.totalorder %s24, 0
      %p51 = por %p49, %p50
      %s53 = sadd.s32 %s52, 1
      %p56 = scmp.eq.s32.totalorder %s18, 1
      %p57 = scmp.ne.s32.totalorder %s52, %s54
      %p58 = scmp.eq.s32.totalorder %s18, 0
      %p59 = por %p57, %p58
      %p60 = scmp.ne.s32.totalorder %s52, %s54
      %p61 = scmp.eq.s32.totalorder %s23, 1
      %p62 = por %p60, %p61
      %p63 = scmp.ne.s32.totalorder %s54, %s55
      %p64 = scmp.eq.s32.totalorder %s23, 0
      %p65 = por %p63, %p64
      %p66 = scmp.ne.s32.totalorder %s54, %s55
      %p67 = scmp.eq.s32.totalorder %s24, 1
      %p68 = por %p66, %p67
      %p70 = scmp.ne.s32.totalorder %s55, %s69
      %p71 = scmp.eq.s32.totalorder %s24, 0
      %p72 = por %p70, %p71
      %s74 = sadd.s32 %s73, 1
      %p77 = scmp.eq.s32.totalorder %s18, 1
      %p78 = scmp.ne.s32.totalorder %s73, %s75
      %p79 = scmp.eq.s32.totalorder %s18, 0
      %p80 = por %p78, %p79
      %p81 = scmp.ne.s32.totalorder %s73, %s75
      %p82 = scmp.eq.s32.totalorder %s23, 1
      %p83 = por %p81, %p82
      %p84 = scmp.ne.s32.totalorder %s75, %s76
      %p85 = scmp.eq.s32.totalorder %s23, 0
      %p86 = por %p84, %p85
      %p87 = scmp.ne.s32.totalorder %s75, %s76
      %p88 = scmp.eq.s32.totalorder %s24, 1
      %p89 = por %p87, %p88
      %p91 = scmp.ne.s32.totalorder %s76, %s90
      %p92 = scmp.eq.s32.totalorder %s24, 0
      %p93 = por %p91, %p92
      %s95 = sadd.s32 %s94, 1
      %p98 = scmp.eq.s32.totalorder %s18, 1
      %p99 = scmp.ne.s32.totalorder %s94, %s96
      %p100 = scmp.eq.s32.totalorder %s18, 0
      %p101 = por %p99, %p100
      %p102 = scmp.ne.s32.totalorder %s94, %s96
      %p103 = scmp.eq.s32.totalorder %s23, 1
      %p104 = por %p102, %p103
      %p105 = scmp.ne.s32.totalorder %s96, %s97
      %p106 = scmp.eq.s32.totalorder %s23, 0
      %p107 = por %p105, %p106
      %p108 = scmp.ne.s32.totalorder %s96, %s97
      %p109 = scmp.eq.s32.totalorder %s24, 1
      %p110 = por %p108, %p109
      %p112 = scmp.ne.s32.totalorder %s97, %s111
      %p113 = scmp.eq.s32.totalorder %s24, 0
      %p114 = por %p112, %p113
      %s116 = sadd.s32 %s115, 1
      %p119 = scmp.eq.s32.totalorder %s18, 1
      %p120 = scmp.ne.s32.totalorder %s115, %s117
      %p121 = scmp.eq.s32.totalorder %s18, 0
      %p122 = por %p120, %p121
      %p123 = scmp.ne.s32.totalorder %s115, %s117
      %p124 = scmp.eq.s32.totalorder %s23, 1
      %p125 = por %p123, %p124
      %p126 = scmp.ne.s32.totalorder %s117, %s118
      %p127 = scmp.eq.s32.totalorder %s23, 0
      %p128 = por %p126, %p127
      %p129 = scmp.ne.s32.totalorder %s117, %s118
      %p130 = scmp.eq.s32.totalorder %s24, 1
      %p131 = por %p129, %p130
      %p133 = scmp.ne.s32.totalorder %s118, %s132
      %p134 = scmp.eq.s32.totalorder %s24, 0
      %p135 = por %p133, %p134
      %s136 = ssub.s32 %s18, %s25
      %p137 = scmp.eq.s32.totalorder %s136, 0
      %s139 = sadd.s32 %s138, 1
      %s140 = scalar_select %p137, %s138, %s139
      %p143 = pneg %p137
      %p144 = scmp.eq.s32.totalorder %s18, 1
      %p145 = por %p143, %p144
      %p146 = scmp.ne.s32.totalorder %s138, %s141
      %p147 = scmp.eq.s32.totalorder %s18, 0
      %p148 = por %p146, %p147
      %p149 = scmp.ne.s32.totalorder %s138, %s141
      %p150 = scmp.eq.s32.totalorder %s23, 1
      %p151 = por %p149, %p150
      %p152 = scmp.ne.s32.totalorder %s141, %s142
      %p153 = scmp.eq.s32.totalorder %s23, 0
      %p154 = por %p152, %p153
      %p155 = scmp.ne.s32.totalorder %s141, %s142
      %p156 = scmp.eq.s32.totalorder %s24, 1
      %p157 = por %p155, %p156
      %p159 = scmp.ne.s32.totalorder %s142, %s158
      %p160 = scmp.eq.s32.totalorder %s24, 0
      %p161 = por %p159, %p160
      %p162 = scmp.le.s32.totalorder 1, %s18
      %p163 = scmp.lt.s32.totalorder %s18, 3
      %p164 = pnand %p162, %p163
      %p165 = pneg %p164
      // Predicated region
      $region9: #{tpu_custom_call.1} parent=5 // pred_check
        _
      $region10: #{tpu_custom_call.1} parent=5 // pred_check_branch
        %167 = sbr.rel (%p164) target = $region12
      $region11: #{tpu_custom_call.1} parent=5 // pred_region
        %s168 = ssub.s32 %s18, 1
        // Predicated region
        $region13: #{tpu_custom_call.1} parent=11 // pred_check
          %p169 = pneg %p65
        $region14: #{tpu_custom_call.1} parent=11 // pred_check_branch
          %171 = sbr.rel (%p169) target = $region16
        $region15: #{tpu_custom_call.1} parent=11 // pred_region
          %173 = vsyncadd [#allocation6], 0
          %s174 = sshll.u32 %s1, 4
          %s175 = int_to_ptr.hbm [resolvable:$true] %s174
          %s176 = sshll.u32 [#allocation5], 4
          %s177 = int_to_ptr.vmem [resolvable:$true] %s176
          %182 = dma.hbm_to_vmem [thread:$0]  %s175, 1024, %s177, [#allocation6], 64, 64, 4
        $region16: #{tpu_custom_call.1} parent=11 // pred_fallthru
          _
        // Predicated region
        $region17: #{tpu_custom_call.1} parent=11 // pred_check
          %p183 = pneg %p86
        $region18: #{tpu_custom_call.1} parent=11 // pred_check_branch
          %185 = sbr.rel (%p183) target = $region20
        $region19: #{tpu_custom_call.1} parent=11 // pred_region
          _
        $region20: #{tpu_custom_call.1} parent=11 // pred_fallthru
          _
        // Predicated region
        $region21: #{tpu_custom_call.1} parent=11 // pred_check
          %p186 = pneg %p107
        $region22: #{tpu_custom_call.1} parent=11 // pred_check_branch
          %188 = sbr.rel (%p186) target = $region24
        $region23: #{tpu_custom_call.1} parent=11 // pred_region
          _
        $region24: #{tpu_custom_call.1} parent=11 // pred_fallthru
          _
        // Predicated region
        $region25: #{tpu_custom_call.1} parent=11 // pred_check
          %p189 = pneg %p128
        $region26: #{tpu_custom_call.1} parent=11 // pred_check_branch
          %191 = sbr.rel (%p189) target = $region28
        $region27: #{tpu_custom_call.1} parent=11 // pred_region
          _
        $region28: #{tpu_custom_call.1} parent=11 // pred_fallthru
          _
      $region12: #{tpu_custom_call.1} parent=5 // pred_fallthru
        _
      %p192 = scmp.lt.s32.totalorder %s18, 2
      // Predicated region
      $region29: #{tpu_custom_call.1} parent=5 // pred_check
        %p193 = pneg %p192
      $region30: #{tpu_custom_call.1} parent=5 // pred_check_branch
        %195 = sbr.rel (%p193) target = $region32
      $region31: #{tpu_custom_call.1} parent=5 // pred_region
        // Predicated region
        $region33: #{tpu_custom_call.1} parent=31 // pred_check
          %p196 = pneg %p38
        $region34: #{tpu_custom_call.1} parent=31 // pred_check_branch
          %198 = sbr.rel (%p196) target = $region36
        $region35: #{tpu_custom_call.1} parent=31 // pred_region
          %s199 = sand.u32 %s28, 1
          %s200 = scalar_lea.sflag [#allocation3], %s199
          %s201 = sand.u32 %s28, 1
          %s202 = smul.addr %s201, 256
          %s203 = scalar_lea.vmem [#allocation2], %s202
          %s204 = smul.u32 32, %s18
          %206 = vsyncadd %s200, 0
          %s207 = smul.addr %s204, 8
          %s208 = scalar_lea.hbm %s0, %s207
          %s209 = sshll.u32 %s208, 4
          %s210 = int_to_ptr.hbm [resolvable:$true] %s209
          %s211 = sshll.u32 %s203, 4
          %s212 = int_to_ptr.vmem [resolvable:$true] %s211
          %217 = dma.hbm_to_vmem [thread:$0]  %s210, 4096, %s212, %s200, 128, 128, 8
        $region36: #{tpu_custom_call.1} parent=31 // pred_fallthru
          _
      $region32: #{tpu_custom_call.1} parent=5 // pred_fallthru
        _
      %p218 = scmp.le.s32.totalorder 1, %s18
      %p219 = scmp.lt.s32.totalorder %s18, 3
      %p220 = pnand %p218, %p219
      %p221 = pneg %p220
      // Predicated region
      $region37: #{tpu_custom_call.1} parent=5 // pred_check
        _
      $region38: #{tpu_custom_call.1} parent=5 // pred_check_branch
        %223 = sbr.rel (%p220) target = $region40
      $region39: #{tpu_custom_call.1} parent=5 // pred_region
        %s224 = ssub.s32 %s18, 1
        %s225 = sand.u32 %s31, 1
        %s226 = scalar_lea.sflag [#allocation3], %s225
        %s227 = sand.u32 %s31, 1
        %s228 = smul.addr %s227, 256
        %s229 = scalar_lea.vmem [#allocation2], %s228
        // Predicated region
        $region41: #{tpu_custom_call.1} parent=39 // pred_check
          %p230 = pneg %p44
        $region42: #{tpu_custom_call.1} parent=39 // pred_check_branch
          %232 = sbr.rel (%p230) target = $region44
        $region43: #{tpu_custom_call.1} parent=39 // pred_region
          %234 = dma.done %s226, 4096
        $region44: #{tpu_custom_call.1} parent=39 // pred_fallthru
          _
        // Predicated region
        $region45: #{tpu_custom_call.1} parent=39 // pred_check
          %p235 = pneg %p65
        $region46: #{tpu_custom_call.1} parent=39 // pred_check_branch
          %237 = sbr.rel (%p235) target = $region48
        $region47: #{tpu_custom_call.1} parent=39 // pred_region
          %239 = dma.done [#allocation6], 1024
        $region48: #{tpu_custom_call.1} parent=39 // pred_fallthru
          _
        %s240 = sand.u32 %s31, 1
        %s241 = scalar_lea.sflag [#allocation3], %s240
        %s242 = sand.u32 %s31, 1
        %s243 = smul.addr %s242, 256
        %s244 = scalar_lea.vmem [#allocation2], %s243
        %p245 = pneg %p44
        %p246 = pneg %p41
        %p247 = pneg %p65
        %p248 = pneg %p62
        %p249 = pneg %p86
        %p250 = pneg %p83
        %p251 = pneg %p107
        %p252 = pneg %p104
        %p253 = pneg %p128
        %p254 = pneg %p125
        %p255 = pneg %p154
        %p256 = pneg %p151
        %s257 = sand.u32 %s141, 1
        %s258 = scalar_lea.sflag [#allocation4], %s257
        %s259 = sand.u32 %s141, 1
        %s260 = smul.addr %s259, 256
        %s261 = scalar_lea.vmem [#allocation7], %s260
        %s262 = smul.u32 32, %s23
        %s263 = smul.u32 32, %s23
        %v264 = vld [vmem:[%s229] sm:$0xff]
        %v265 = vld [vmem:[%s229 + $0x8] sm:$0xff]
        %v266 = vld [vmem:[%s229 + $0x10] sm:$0xff]
        %v267 = vld [vmem:[%s229 + $0x18] sm:$0xff]
        %v268 = vld [vmem:[%s229 + $0x20] sm:$0xff]
        %v269 = vld [vmem:[%s229 + $0x28] sm:$0xff]
        %v270 = vld [vmem:[%s229 + $0x30] sm:$0xff]
        %v271 = vld [vmem:[%s229 + $0x38] sm:$0xff]
        %v272 = vld [vmem:[%s229 + $0x40] sm:$0xff]
        %v273 = vld [vmem:[%s229 + $0x48] sm:$0xff]
        %v274 = vld [vmem:[%s229 + $0x50] sm:$0xff]
        %v275 = vld [vmem:[%s229 + $0x58] sm:$0xff]
        %v276 = vld [vmem:[%s229 + $0x60] sm:$0xff]
        %v277 = vld [vmem:[%s229 + $0x68] sm:$0xff]
        %v278 = vld [vmem:[%s229 + $0x70] sm:$0xff]
        %v279 = vld [vmem:[%s229 + $0x78] sm:$0xff]
        %v280 = vld [vmem:[%s229 + $0x80] sm:$0xff]
        %v281 = vld [vmem:[%s229 + $0x88] sm:$0xff]
        %v282 = vld [vmem:[%s229 + $0x90] sm:$0xff]
        %v283 = vld [vmem:[%s229 + $0x98] sm:$0xff]
        %v284 = vld [vmem:[%s229 + $0xa0] sm:$0xff]
        %v285 = vld [vmem:[%s229 + $0xa8] sm:$0xff]
        %v286 = vld [vmem:[%s229 + $0xb0] sm:$0xff]
        %v287 = vld [vmem:[%s229 + $0xb8] sm:$0xff]
        %v288 = vld [vmem:[%s229 + $0xc0] sm:$0xff]
        %v289 = vld [vmem:[%s229 + $0xc8] sm:$0xff]
        %v290 = vld [vmem:[%s229 + $0xd0] sm:$0xff]
        %v291 = vld [vmem:[%s229 + $0xd8] sm:$0xff]
        %v292 = vld [vmem:[%s229 + $0xe0] sm:$0xff]
        %v293 = vld [vmem:[%s229 + $0xe8] sm:$0xff]
        %v294 = vld [vmem:[%s229 + $0xf0] sm:$0xff]
        %v295 = vld [vmem:[%s229 + $0xf8] sm:$0xff]
        %v296 = vld [vmem:[%s3] sm:$0x1]
        %v297 = vld [vmem:[%s4] sm:$0x1]
        %298 = vadd.xlane.f32.xlu0 %v264
        %v299 = vpop.xlane.xlu0 %298
        %300 = vadd.xlane.f32.xlu0 %v265
        %v301 = vpop.xlane.xlu0 %300
        %302 = vadd.xlane.f32.xlu0 %v266
        %v303 = vpop.xlane.xlu0 %302
        %304 = vadd.xlane.f32.xlu0 %v267
        %v305 = vpop.xlane.xlu0 %304
        %306 = vadd.xlane.f32.xlu0 %v268
        %v307 = vpop.xlane.xlu0 %306
        %308 = vadd.xlane.f32.xlu0 %v269
        %v309 = vpop.xlane.xlu0 %308
        %310 = vadd.xlane.f32.xlu0 %v270
        %v311 = vpop.xlane.xlu0 %310
        %312 = vadd.xlane.f32.xlu0 %v271
        %v313 = vpop.xlane.xlu0 %312
        %314 = vadd.xlane.f32.xlu0 %v272
        %v315 = vpop.xlane.xlu0 %314
        %316 = vadd.xlane.f32.xlu0 %v273
        %v317 = vpop.xlane.xlu0 %316
        %318 = vadd.xlane.f32.xlu0 %v274
        %v319 = vpop.xlane.xlu0 %318
        %320 = vadd.xlane.f32.xlu0 %v275
        %v321 = vpop.xlane.xlu0 %320
        %322 = vadd.xlane.f32.xlu0 %v276
        %v323 = vpop.xlane.xlu0 %322
        %324 = vadd.xlane.f32.xlu0 %v277
        %v325 = vpop.xlane.xlu0 %324
        %326 = vadd.xlane.f32.xlu0 %v278
        %v327 = vpop.xlane.xlu0 %326
        %328 = vadd.xlane.f32.xlu0 %v279
        %v329 = vpop.xlane.xlu0 %328
        %330 = vadd.xlane.f32.xlu0 %v280
        %v331 = vpop.xlane.xlu0 %330
        %332 = vadd.xlane.f32.xlu0 %v281
        %v333 = vpop.xlane.xlu0 %332
        %334 = vadd.xlane.f32.xlu0 %v282
        %v335 = vpop.xlane.xlu0 %334
        %336 = vadd.xlane.f32.xlu0 %v283
        %v337 = vpop.xlane.xlu0 %336
        %338 = vadd.xlane.f32.xlu0 %v284
        %v339 = vpop.xlane.xlu0 %338
        %340 = vadd.xlane.f32.xlu0 %v285
        %v341 = vpop.xlane.xlu0 %340
        %342 = vadd.xlane.f32.xlu0 %v286
        %v343 = vpop.xlane.xlu0 %342
        %344 = vadd.xlane.f32.xlu0 %v287
        %v345 = vpop.xlane.xlu0 %344
        %346 = vadd.xlane.f32.xlu0 %v288
        %v347 = vpop.xlane.xlu0 %346
        %348 = vadd.xlane.f32.xlu0 %v289
        %v349 = vpop.xlane.xlu0 %348
        %350 = vadd.xlane.f32.xlu0 %v290
        %v351 = vpop.xlane.xlu0 %350
        %352 = vadd.xlane.f32.xlu0 %v291
        %v353 = vpop.xlane.xlu0 %352
        %354 = vadd.xlane.f32.xlu0 %v292
        %v355 = vpop.xlane.xlu0 %354
        %356 = vadd.xlane.f32.xlu0 %v293
        %v357 = vpop.xlane.xlu0 %356
        %358 = vadd.xlane.f32.xlu0 %v294
        %v359 = vpop.xlane.xlu0 %358
        %360 = vadd.xlane.f32.xlu0 %v295
        %v361 = vpop.xlane.xlu0 %360
        %v362 = vrcp.pop 128.0
        %v363 = vmul.f32 128.0, %v362
        %v364 = vsub.f32 1.0, %v363
        %v365 = vmul.f32 %v362, %v364
        %v366 = vadd.f32 %v362, %v365
        %vm367 = vweird.f32 %v362
        %v368 = vsel %vm367, %v362, %v366
        %v369 = vmul.f32 %v299, %v368
        %v370 = vmul.f32 %v301, %v368
        %v371 = vmul.f32 %v303, %v368
        %v372 = vmul.f32 %v305, %v368
        %v373 = vmul.f32 %v307, %v368
        %v374 = vmul.f32 %v309, %v368
        %v375 = vmul.f32 %v311, %v368
        %v376 = vmul.f32 %v313, %v368
        %v377 = vmul.f32 %v315, %v368
        %v378 = vmul.f32 %v317, %v368
        %v379 = vmul.f32 %v319, %v368
        %v380 = vmul.f32 %v321, %v368
        %v381 = vmul.f32 %v323, %v368
        %v382 = vmul.f32 %v325, %v368
        %v383 = vmul.f32 %v327, %v368
        %v384 = vmul.f32 %v329, %v368
        %v385 = vmul.f32 %v331, %v368
        %v386 = vmul.f32 %v333, %v368
        %v387 = vmul.f32 %v335, %v368
        %v388 = vmul.f32 %v337, %v368
        %v389 = vmul.f32 %v339, %v368
        %v390 = vmul.f32 %v341, %v368
        %v391 = vmul.f32 %v343, %v368
        %v392 = vmul.f32 %v345, %v368
        %v393 = vmul.f32 %v347, %v368
        %v394 = vmul.f32 %v349, %v368
        %v395 = vmul.f32 %v351, %v368
        %v396 = vmul.f32 %v353, %v368
        %v397 = vmul.f32 %v355, %v368
        %v398 = vmul.f32 %v357, %v368
        %v399 = vmul.f32 %v359, %v368
        %v400 = vmul.f32 %v361, %v368
        %v401 = vsub.f32 %v264, %v369
        %v402 = vsub.f32 %v265, %v370
        %v403 = vsub.f32 %v266, %v371
        %v404 = vsub.f32 %v267, %v372
        %v405 = vsub.f32 %v268, %v373
        %v406 = vsub.f32 %v269, %v374
        %v407 = vsub.f32 %v270, %v375
        %v408 = vsub.f32 %v271, %v376
        %v409 = vsub.f32 %v272, %v377
        %v410 = vsub.f32 %v273, %v378
        %v411 = vsub.f32 %v274, %v379
        %v412 = vsub.f32 %v275, %v380
        %v413 = vsub.f32 %v276, %v381
        %v414 = vsub.f32 %v277, %v382
        %v415 = vsub.f32 %v278, %v383
        %v416 = vsub.f32 %v279, %v384
        %v417 = vsub.f32 %v280, %v385
        %v418 = vsub.f32 %v281, %v386
        %v419 = vsub.f32 %v282, %v387
        %v420 = vsub.f32 %v283, %v388
        %v421 = vsub.f32 %v284, %v389
        %v422 = vsub.f32 %v285, %v390
        %v423 = vsub.f32 %v286, %v391
        %v424 = vsub.f32 %v287, %v392
        %v425 = vsub.f32 %v288, %v393
        %v426 = vsub.f32 %v289, %v394
        %v427 = vsub.f32 %v290, %v395
        %v428 = vsub.f32 %v291, %v396
        %v429 = vsub.f32 %v292, %v397
        %v430 = vsub.f32 %v293, %v398
        %v431 = vsub.f32 %v294, %v399
        %v432 = vsub.f32 %v295, %v400
        %v433 = vmul.f32 %v401, %v401
        %v434 = vmul.f32 %v402, %v402
        %v435 = vmul.f32 %v403, %v403
        %v436 = vmul.f32 %v404, %v404
        %v437 = vmul.f32 %v405, %v405
        %v438 = vmul.f32 %v406, %v406
        %v439 = vmul.f32 %v407, %v407
        %v440 = vmul.f32 %v408, %v408
        %v441 = vmul.f32 %v409, %v409
        %v442 = vmul.f32 %v410, %v410
        %v443 = vmul.f32 %v411, %v411
        %v444 = vmul.f32 %v412, %v412
        %v445 = vmul.f32 %v413, %v413
        %v446 = vmul.f32 %v414, %v414
        %v447 = vmul.f32 %v415, %v415
        %v448 = vmul.f32 %v416, %v416
        %v449 = vmul.f32 %v417, %v417
        %v450 = vmul.f32 %v418, %v418
        %v451 = vmul.f32 %v419, %v419
        %v452 = vmul.f32 %v420, %v420
        %v453 = vmul.f32 %v421, %v421
        %v454 = vmul.f32 %v422, %v422
        %v455 = vmul.f32 %v423, %v423
        %v456 = vmul.f32 %v424, %v424
        %v457 = vmul.f32 %v425, %v425
        %v458 = vmul.f32 %v426, %v426
        %v459 = vmul.f32 %v427, %v427
        %v460 = vmul.f32 %v428, %v428
        %v461 = vmul.f32 %v429, %v429
        %v462 = vmul.f32 %v430, %v430
        %v463 = vmul.f32 %v431, %v431
        %v464 = vmul.f32 %v432, %v432
        %465 = vadd.xlane.f32.xlu0 %v433
        %v466 = vpop.xlane.xlu0 %465
        %467 = vadd.xlane.f32.xlu0 %v434
        %v468 = vpop.xlane.xlu0 %467
        %469 = vadd.xlane.f32.xlu0 %v435
        %v470 = vpop.xlane.xlu0 %469
        %471 = vadd.xlane.f32.xlu0 %v436
        %v472 = vpop.xlane.xlu0 %471
        %473 = vadd.xlane.f32.xlu0 %v437
        %v474 = vpop.xlane.xlu0 %473
        %475 = vadd.xlane.f32.xlu0 %v438
        %v476 = vpop.xlane.xlu0 %475
        %477 = vadd.xlane.f32.xlu0 %v439
        %v478 = vpop.xlane.xlu0 %477
        %479 = vadd.xlane.f32.xlu0 %v440
        %v480 = vpop.xlane.xlu0 %479
        %481 = vadd.xlane.f32.xlu0 %v441
        %v482 = vpop.xlane.xlu0 %481
        %483 = vadd.xlane.f32.xlu0 %v442
        %v484 = vpop.xlane.xlu0 %483
        %485 = vadd.xlane.f32.xlu0 %v443
        %v486 = vpop.xlane.xlu0 %485
        %487 = vadd.xlane.f32.xlu0 %v444
        %v488 = vpop.xlane.xlu0 %487
        %489 = vadd.xlane.f32.xlu0 %v445
        %v490 = vpop.xlane.xlu0 %489
        %491 = vadd.xlane.f32.xlu0 %v446
        %v492 = vpop.xlane.xlu0 %491
        %493 = vadd.xlane.f32.xlu0 %v447
        %v494 = vpop.xlane.xlu0 %493
        %495 = vadd.xlane.f32.xlu0 %v448
        %v496 = vpop.xlane.xlu0 %495
        %497 = vadd.xlane.f32.xlu0 %v449
        %v498 = vpop.xlane.xlu0 %497
        %499 = vadd.xlane.f32.xlu0 %v450
        %v500 = vpop.xlane.xlu0 %499
        %501 = vadd.xlane.f32.xlu0 %v451
        %v502 = vpop.xlane.xlu0 %501
        %503 = vadd.xlane.f32.xlu0 %v452
        %v504 = vpop.xlane.xlu0 %503
        %505 = vadd.xlane.f32.xlu0 %v453
        %v506 = vpop.xlane.xlu0 %505
        %507 = vadd.xlane.f32.xlu0 %v454
        %v508 = vpop.xlane.xlu0 %507
        %509 = vadd.xlane.f32.xlu0 %v455
        %v510 = vpop.xlane.xlu0 %509
        %511 = vadd.xlane.f32.xlu0 %v456
        %v512 = vpop.xlane.xlu0 %511
        %513 = vadd.xlane.f32.xlu0 %v457
        %v514 = vpop.xlane.xlu0 %513
        %515 = vadd.xlane.f32.xlu0 %v458
        %v516 = vpop.xlane.xlu0 %515
        %517 = vadd.xlane.f32.xlu0 %v459
        %v518 = vpop.xlane.xlu0 %517
        %519 = vadd.xlane.f32.xlu0 %v460
        %v520 = vpop.xlane.xlu0 %519
        %521 = vadd.xlane.f32.xlu0 %v461
        %v522 = vpop.xlane.xlu0 %521
        %523 = vadd.xlane.f32.xlu0 %v462
        %v524 = vpop.xlane.xlu0 %523
        %525 = vadd.xlane.f32.xlu0 %v463
        %v526 = vpop.xlane.xlu0 %525
        %527 = vadd.xlane.f32.xlu0 %v464
        %v528 = vpop.xlane.xlu0 %527
        %v529 = vmul.f32 %v466, %v368
        %v530 = vmul.f32 %v468, %v368
        %v531 = vmul.f32 %v470, %v368
        %v532 = vmul.f32 %v472, %v368
        %v533 = vmul.f32 %v474, %v368
        %v534 = vmul.f32 %v476, %v368
        %v535 = vmul.f32 %v478, %v368
        %v536 = vmul.f32 %v480, %v368
        %v537 = vmul.f32 %v482, %v368
        %v538 = vmul.f32 %v484, %v368
        %v539 = vmul.f32 %v486, %v368
        %v540 = vmul.f32 %v488, %v368
        %v541 = vmul.f32 %v490, %v368
        %v542 = vmul.f32 %v492, %v368
        %v543 = vmul.f32 %v494, %v368
        %v544 = vmul.f32 %v496, %v368
        %v545 = vmul.f32 %v498, %v368
        %v546 = vmul.f32 %v500, %v368
        %v547 = vmul.f32 %v502, %v368
        %v548 = vmul.f32 %v504, %v368
        %v549 = vmul.f32 %v506, %v368
        %v550 = vmul.f32 %v508, %v368
        %v551 = vmul.f32 %v510, %v368
        %v552 = vmul.f32 %v512, %v368
        %v553 = vmul.f32 %v514, %v368
        %v554 = vmul.f32 %v516, %v368
        %v555 = vmul.f32 %v518, %v368
        %v556 = vmul.f32 %v520, %v368
        %v557 = vmul.f32 %v522, %v368
        %v558 = vmul.f32 %v524, %v368
        %v559 = vmul.f32 %v526, %v368
        %v560 = vmul.f32 %v528, %v368
        %v561 = vadd.f32 %v529, 1e-05
        %v562 = vadd.f32 %v530, 1e-05
        %v563 = vadd.f32 %v531, 1e-05
        %v564 = vadd.f32 %v532, 1e-05
        %v565 = vadd.f32 %v533, 1e-05
        %v566 = vadd.f32 %v534, 1e-05
        %v567 = vadd.f32 %v535, 1e-05
        %v568 = vadd.f32 %v536, 1e-05
        %v569 = vadd.f32 %v537, 1e-05
        %v570 = vadd.f32 %v538, 1e-05
        %v571 = vadd.f32 %v539, 1e-05
        %v572 = vadd.f32 %v540, 1e-05
        %v573 = vadd.f32 %v541, 1e-05
        %v574 = vadd.f32 %v542, 1e-05
        %v575 = vadd.f32 %v543, 1e-05
        %v576 = vadd.f32 %v544, 1e-05
        %v577 = vadd.f32 %v545, 1e-05
        %v578 = vadd.f32 %v546, 1e-05
        %v579 = vadd.f32 %v547, 1e-05
        %v580 = vadd.f32 %v548, 1e-05
        %v581 = vadd.f32 %v549, 1e-05
        %v582 = vadd.f32 %v550, 1e-05
        %v583 = vadd.f32 %v551, 1e-05
        %v584 = vadd.f32 %v552, 1e-05
        %v585 = vadd.f32 %v553, 1e-05
        %v586 = vadd.f32 %v554, 1e-05
        %v587 = vadd.f32 %v555, 1e-05
        %v588 = vadd.f32 %v556, 1e-05
        %v589 = vadd.f32 %v557, 1e-05
        %v590 = vadd.f32 %v558, 1e-05
        %v591 = vadd.f32 %v559, 1e-05
        %v592 = vadd.f32 %v560, 1e-05
        %v593 = vrsqrt.pop %v561
        %v594 = vmul.f32 %v593, %v561
        %v595 = vmul.f32 %v594, %v593
        %v596 = vmul.f32 0.5, %v595
        %v597 = vsub.f32 1.5, %v596
        %v598 = vmul.f32 %v593, %v597
        %vm599 = vweird.f32 %v561
        %vm600 = vweird.f32 %v593
        %vm601 = vmor %vm599, %vm600
        %v602 = vsel %vm601, %v593, %v598
        %v603 = vrsqrt.pop %v562
        %v604 = vmul.f32 %v603, %v562
        %v605 = vmul.f32 %v604, %v603
        %v606 = vmul.f32 0.5, %v605
        %v607 = vsub.f32 1.5, %v606
        %v608 = vmul.f32 %v603, %v607
        %vm609 = vweird.f32 %v562
        %vm610 = vweird.f32 %v603
        %vm611 = vmor %vm609, %vm610
        %v612 = vsel %vm611, %v603, %v608
        %v613 = vrsqrt.pop %v563
        %v614 = vmul.f32 %v613, %v563
        %v615 = vmul.f32 %v614, %v613
        %v616 = vmul.f32 0.5, %v615
        %v617 = vsub.f32 1.5, %v616
        %v618 = vmul.f32 %v613, %v617
        %vm619 = vweird.f32 %v563
        %vm620 = vweird.f32 %v613
        %vm621 = vmor %vm619, %vm620
        %v622 = vsel %vm621, %v613, %v618
        %v623 = vrsqrt.pop %v564
        %v624 = vmul.f32 %v623, %v564
        %v625 = vmul.f32 %v624, %v623
        %v626 = vmul.f32 0.5, %v625
        %v627 = vsub.f32 1.5, %v626
        %v628 = vmul.f32 %v623, %v627
        %vm629 = vweird.f32 %v564
        %vm630 = vweird.f32 %v623
        %vm631 = vmor %vm629, %vm630
        %v632 = vsel %vm631, %v623, %v628
        %v633 = vrsqrt.pop %v565
        %v634 = vmul.f32 %v633, %v565
        %v635 = vmul.f32 %v634, %v633
        %v636 = vmul.f32 0.5, %v635
        %v637 = vsub.f32 1.5, %v636
        %v638 = vmul.f32 %v633, %v637
        %vm639 = vweird.f32 %v565
        %vm640 = vweird.f32 %v633
        %vm641 = vmor %vm639, %vm640
        %v642 = vsel %vm641, %v633, %v638
        %v643 = vrsqrt.pop %v566
        %v644 = vmul.f32 %v643, %v566
        %v645 = vmul.f32 %v644, %v643
        %v646 = vmul.f32 0.5, %v645
        %v647 = vsub.f32 1.5, %v646
        %v648 = vmul.f32 %v643, %v647
        %vm649 = vweird.f32 %v566
        %vm650 = vweird.f32 %v643
        %vm651 = vmor %vm649, %vm650
        %v652 = vsel %vm651, %v643, %v648
        %v653 = vrsqrt.pop %v567
        %v654 = vmul.f32 %v653, %v567
        %v655 = vmul.f32 %v654, %v653
        %v656 = vmul.f32 0.5, %v655
        %v657 = vsub.f32 1.5, %v656
        %v658 = vmul.f32 %v653, %v657
        %vm659 = vweird.f32 %v567
        %vm660 = vweird.f32 %v653
        %vm661 = vmor %vm659, %vm660
        %v662 = vsel %vm661, %v653, %v658
        %v663 = vrsqrt.pop %v568
        %v664 = vmul.f32 %v663, %v568
        %v665 = vmul.f32 %v664, %v663
        %v666 = vmul.f32 0.5, %v665
        %v667 = vsub.f32 1.5, %v666
        %v668 = vmul.f32 %v663, %v667
        %vm669 = vweird.f32 %v568
        %vm670 = vweird.f32 %v663
        %vm671 = vmor %vm669, %vm670
        %v672 = vsel %vm671, %v663, %v668
        %v673 = vrsqrt.pop %v569
        %v674 = vmul.f32 %v673, %v569
        %v675 = vmul.f32 %v674, %v673
        %v676 = vmul.f32 0.5, %v675
        %v677 = vsub.f32 1.5, %v676
        %v678 = vmul.f32 %v673, %v677
        %vm679 = vweird.f32 %v569
        %vm680 = vweird.f32 %v673
        %vm681 = vmor %vm679, %vm680
        %v682 = vsel %vm681, %v673, %v678
        %v683 = vrsqrt.pop %v570
        %v684 = vmul.f32 %v683, %v570
        %v685 = vmul.f32 %v684, %v683
        %v686 = vmul.f32 0.5, %v685
        %v687 = vsub.f32 1.5, %v686
        %v688 = vmul.f32 %v683, %v687
        %vm689 = vweird.f32 %v570
        %vm690 = vweird.f32 %v683
        %vm691 = vmor %vm689, %vm690
        %v692 = vsel %vm691, %v683, %v688
        %v693 = vrsqrt.pop %v571
        %v694 = vmul.f32 %v693, %v571
        %v695 = vmul.f32 %v694, %v693
        %v696 = vmul.f32 0.5, %v695
        %v697 = vsub.f32 1.5, %v696
        %v698 = vmul.f32 %v693, %v697
        %vm699 = vweird.f32 %v571
        %vm700 = vweird.f32 %v693
        %vm701 = vmor %vm699, %vm700
        %v702 = vsel %vm701, %v693, %v698
        %v703 = vrsqrt.pop %v572
        %v704 = vmul.f32 %v703, %v572
        %v705 = vmul.f32 %v704, %v703
        %v706 = vmul.f32 0.5, %v705
        %v707 = vsub.f32 1.5, %v706
        %v708 = vmul.f32 %v703, %v707
        %vm709 = vweird.f32 %v572
        %vm710 = vweird.f32 %v703
        %vm711 = vmor %vm709, %vm710
        %v712 = vsel %vm711, %v703, %v708
        %v713 = vrsqrt.pop %v573
        %v714 = vmul.f32 %v713, %v573
        %v715 = vmul.f32 %v714, %v713
        %v716 = vmul.f32 0.5, %v715
        %v717 = vsub.f32 1.5, %v716
        %v718 = vmul.f32 %v713, %v717
        %vm719 = vweird.f32 %v573
        %vm720 = vweird.f32 %v713
        %vm721 = vmor %vm719, %vm720
        %v722 = vsel %vm721, %v713, %v718
        %v723 = vrsqrt.pop %v574
        %v724 = vmul.f32 %v723, %v574
        %v725 = vmul.f32 %v724, %v723
        %v726 = vmul.f32 0.5, %v725
        %v727 = vsub.f32 1.5, %v726
        %v728 = vmul.f32 %v723, %v727
        %vm729 = vweird.f32 %v574
        %vm730 = vweird.f32 %v723
        %vm731 = vmor %vm729, %vm730
        %v732 = vsel %vm731, %v723, %v728
        %v733 = vrsqrt.pop %v575
        %v734 = vmul.f32 %v733, %v575
        %v735 = vmul.f32 %v734, %v733
        %v736 = vmul.f32 0.5, %v735
        %v737 = vsub.f32 1.5, %v736
        %v738 = vmul.f32 %v733, %v737
        %vm739 = vweird.f32 %v575
        %vm740 = vweird.f32 %v733
        %vm741 = vmor %vm739, %vm740
        %v742 = vsel %vm741, %v733, %v738
        %v743 = vrsqrt.pop %v576
        %v744 = vmul.f32 %v743, %v576
        %v745 = vmul.f32 %v744, %v743
        %v746 = vmul.f32 0.5, %v745
        %v747 = vsub.f32 1.5, %v746
        %v748 = vmul.f32 %v743, %v747
        %vm749 = vweird.f32 %v576
        %vm750 = vweird.f32 %v743
        %vm751 = vmor %vm749, %vm750
        %v752 = vsel %vm751, %v743, %v748
        %v753 = vrsqrt.pop %v577
        %v754 = vmul.f32 %v753, %v577
        %v755 = vmul.f32 %v754, %v753
        %v756 = vmul.f32 0.5, %v755
        %v757 = vsub.f32 1.5, %v756
        %v758 = vmul.f32 %v753, %v757
        %vm759 = vweird.f32 %v577
        %vm760 = vweird.f32 %v753
        %vm761 = vmor %vm759, %vm760
        %v762 = vsel %vm761, %v753, %v758
        %v763 = vrsqrt.pop %v578
        %v764 = vmul.f32 %v763, %v578
        %v765 = vmul.f32 %v764, %v763
        %v766 = vmul.f32 0.5, %v765
        %v767 = vsub.f32 1.5, %v766
        %v768 = vmul.f32 %v763, %v767
        %vm769 = vweird.f32 %v578
        %vm770 = vweird.f32 %v763
        %vm771 = vmor %vm769, %vm770
        %v772 = vsel %vm771, %v763, %v768
        %v773 = vrsqrt.pop %v579
        %v774 = vmul.f32 %v773, %v579
        %v775 = vmul.f32 %v774, %v773
        %v776 = vmul.f32 0.5, %v775
        %v777 = vsub.f32 1.5, %v776
        %v778 = vmul.f32 %v773, %v777
        %vm779 = vweird.f32 %v579
        %vm780 = vweird.f32 %v773
        %vm781 = vmor %vm779, %vm780
        %v782 = vsel %vm781, %v773, %v778
        %v783 = vrsqrt.pop %v580
        %v784 = vmul.f32 %v783, %v580
        %v785 = vmul.f32 %v784, %v783
        %v786 = vmul.f32 0.5, %v785
        %v787 = vsub.f32 1.5, %v786
        %v788 = vmul.f32 %v783, %v787
        %vm789 = vweird.f32 %v580
        %vm790 = vweird.f32 %v783
        %vm791 = vmor %vm789, %vm790
        %v792 = vsel %vm791, %v783, %v788
        %v793 = vrsqrt.pop %v581
        %v794 = vmul.f32 %v793, %v581
        %v795 = vmul.f32 %v794, %v793
        %v796 = vmul.f32 0.5, %v795
        %v797 = vsub.f32 1.5, %v796
        %v798 = vmul.f32 %v793, %v797
        %vm799 = vweird.f32 %v581
        %vm800 = vweird.f32 %v793
        %vm801 = vmor %vm799, %vm800
        %v802 = vsel %vm801, %v793, %v798
        %v803 = vrsqrt.pop %v582
        %v804 = vmul.f32 %v803, %v582
        %v805 = vmul.f32 %v804, %v803
        %v806 = vmul.f32 0.5, %v805
        %v807 = vsub.f32 1.5, %v806
        %v808 = vmul.f32 %v803, %v807
        %vm809 = vweird.f32 %v582
        %vm810 = vweird.f32 %v803
        %vm811 = vmor %vm809, %vm810
        %v812 = vsel %vm811, %v803, %v808
        %v813 = vrsqrt.pop %v583
        %v814 = vmul.f32 %v813, %v583
        %v815 = vmul.f32 %v814, %v813
        %v816 = vmul.f32 0.5, %v815
        %v817 = vsub.f32 1.5, %v816
        %v818 = vmul.f32 %v813, %v817
        %vm819 = vweird.f32 %v583
        %vm820 = vweird.f32 %v813
        %vm821 = vmor %vm819, %vm820
        %v822 = vsel %vm821, %v813, %v818
        %v823 = vrsqrt.pop %v584
        %v824 = vmul.f32 %v823, %v584
        %v825 = vmul.f32 %v824, %v823
        %v826 = vmul.f32 0.5, %v825
        %v827 = vsub.f32 1.5, %v826
        %v828 = vmul.f32 %v823, %v827
        %vm829 = vweird.f32 %v584
        %vm830 = vweird.f32 %v823
        %vm831 = vmor %vm829, %vm830
        %v832 = vsel %vm831, %v823, %v828
        %v833 = vrsqrt.pop %v585
        %v834 = vmul.f32 %v833, %v585
        %v835 = vmul.f32 %v834, %v833
        %v836 = vmul.f32 0.5, %v835
        %v837 = vsub.f32 1.5, %v836
        %v838 = vmul.f32 %v833, %v837
        %vm839 = vweird.f32 %v585
        %vm840 = vweird.f32 %v833
        %vm841 = vmor %vm839, %vm840
        %v842 = vsel %vm841, %v833, %v838
        %v843 = vrsqrt.pop %v586
        %v844 = vmul.f32 %v843, %v586
        %v845 = vmul.f32 %v844, %v843
        %v846 = vmul.f32 0.5, %v845
        %v847 = vsub.f32 1.5, %v846
        %v848 = vmul.f32 %v843, %v847
        %vm849 = vweird.f32 %v586
        %vm850 = vweird.f32 %v843
        %vm851 = vmor %vm849, %vm850
        %v852 = vsel %vm851, %v843, %v848
        %v853 = vrsqrt.pop %v587
        %v854 = vmul.f32 %v853, %v587
        %v855 = vmul.f32 %v854, %v853
        %v856 = vmul.f32 0.5, %v855
        %v857 = vsub.f32 1.5, %v856
        %v858 = vmul.f32 %v853, %v857
        %vm859 = vweird.f32 %v587
        %vm860 = vweird.f32 %v853
        %vm861 = vmor %vm859, %vm860
        %v862 = vsel %vm861, %v853, %v858
        %v863 = vrsqrt.pop %v588
        %v864 = vmul.f32 %v863, %v588
        %v865 = vmul.f32 %v864, %v863
        %v866 = vmul.f32 0.5, %v865
        %v867 = vsub.f32 1.5, %v866
        %v868 = vmul.f32 %v863, %v867
        %vm869 = vweird.f32 %v588
        %vm870 = vweird.f32 %v863
        %vm871 = vmor %vm869, %vm870
        %v872 = vsel %vm871, %v863, %v868
        %v873 = vrsqrt.pop %v589
        %v874 = vmul.f32 %v873, %v589
        %v875 = vmul.f32 %v874, %v873
        %v876 = vmul.f32 0.5, %v875
        %v877 = vsub.f32 1.5, %v876
        %v878 = vmul.f32 %v873, %v877
        %vm879 = vweird.f32 %v589
        %vm880 = vweird.f32 %v873
        %vm881 = vmor %vm879, %vm880
        %v882 = vsel %vm881, %v873, %v878
        %v883 = vrsqrt.pop %v590
        %v884 = vmul.f32 %v883, %v590
        %v885 = vmul.f32 %v884, %v883
        %v886 = vmul.f32 0.5, %v885
        %v887 = vsub.f32 1.5, %v886
        %v888 = vmul.f32 %v883, %v887
        %vm889 = vweird.f32 %v590
        %vm890 = vweird.f32 %v883
        %vm891 = vmor %vm889, %vm890
        %v892 = vsel %vm891, %v883, %v888
        %v893 = vrsqrt.pop %v591
        %v894 = vmul.f32 %v893, %v591
        %v895 = vmul.f32 %v894, %v893
        %v896 = vmul.f32 0.5, %v895
        %v897 = vsub.f32 1.5, %v896
        %v898 = vmul.f32 %v893, %v897
        %vm899 = vweird.f32 %v591
        %vm900 = vweird.f32 %v893
        %vm901 = vmor %vm899, %vm900
        %v902 = vsel %vm901, %v893, %v898
        %v903 = vrsqrt.pop %v592
        %v904 = vmul.f32 %v903, %v592
        %v905 = vmul.f32 %v904, %v903
        %v906 = vmul.f32 0.5, %v905
        %v907 = vsub.f32 1.5, %v906
        %v908 = vmul.f32 %v903, %v907
        %vm909 = vweird.f32 %v592
        %vm910 = vweird.f32 %v903
        %vm911 = vmor %vm909, %vm910
        %v912 = vsel %vm911, %v903, %v908
        %v913 = vmul.f32 %v401, %v602
        %v914 = vmul.f32 %v402, %v612
        %v915 = vmul.f32 %v403, %v622
        %v916 = vmul.f32 %v404, %v632
        %v917 = vmul.f32 %v405, %v642
        %v918 = vmul.f32 %v406, %v652
        %v919 = vmul.f32 %v407, %v662
        %v920 = vmul.f32 %v408, %v672
        %v921 = vmul.f32 %v409, %v682
        %v922 = vmul.f32 %v410, %v692
        %v923 = vmul.f32 %v411, %v702
        %v924 = vmul.f32 %v412, %v712
        %v925 = vmul.f32 %v413, %v722
        %v926 = vmul.f32 %v414, %v732
        %v927 = vmul.f32 %v415, %v742
        %v928 = vmul.f32 %v416, %v752
        %v929 = vmul.f32 %v417, %v762
        %v930 = vmul.f32 %v418, %v772
        %v931 = vmul.f32 %v419, %v782
        %v932 = vmul.f32 %v420, %v792
        %v933 = vmul.f32 %v421, %v802
        %v934 = vmul.f32 %v422, %v812
        %v935 = vmul.f32 %v423, %v822
        %v936 = vmul.f32 %v424, %v832
        %v937 = vmul.f32 %v425, %v842
        %v938 = vmul.f32 %v426, %v852
        %v939 = vmul.f32 %v427, %v862
        %v940 = vmul.f32 %v428, %v872
        %v941 = vmul.f32 %v429, %v882
        %v942 = vmul.f32 %v430, %v892
        %v943 = vmul.f32 %v431, %v902
        %v944 = vmul.f32 %v432, %v912
        %v946 = vperm.slane %v296, 0
        %v948 = vmul.f32 %v913, %v946
        %v949 = vmul.f32 %v914, %v946
        %v950 = vmul.f32 %v915, %v946
        %v951 = vmul.f32 %v916, %v946
        %v952 = vmul.f32 %v917, %v946
        %v953 = vmul.f32 %v918, %v946
        %v954 = vmul.f32 %v919, %v946
        %v955 = vmul.f32 %v920, %v946
        %v956 = vmul.f32 %v921, %v946
        %v957 = vmul.f32 %v922, %v946
        %v958 = vmul.f32 %v923, %v946
        %v959 = vmul.f32 %v924, %v946
        %v960 = vmul.f32 %v925, %v946
        %v961 = vmul.f32 %v926, %v946
        %v962 = vmul.f32 %v927, %v946
        %v963 = vmul.f32 %v928, %v946
        %v964 = vmul.f32 %v929, %v946
        %v965 = vmul.f32 %v930, %v946
        %v966 = vmul.f32 %v931, %v946
        %v967 = vmul.f32 %v932, %v946
        %v968 = vmul.f32 %v933, %v946
        %v969 = vmul.f32 %v934, %v946
        %v970 = vmul.f32 %v935, %v946
        %v971 = vmul.f32 %v936, %v946
        %v972 = vmul.f32 %v937, %v946
        %v973 = vmul.f32 %v938, %v946
        %v974 = vmul.f32 %v939, %v946
        %v975 = vmul.f32 %v940, %v946
        %v976 = vmul.f32 %v941, %v946
        %v977 = vmul.f32 %v942, %v946
        %v978 = vmul.f32 %v943, %v946
        %v979 = vmul.f32 %v944, %v946
        %v981 = vperm.slane %v297, 0
        %v983 = vadd.f32 %v948, %v981
        %v984 = vadd.f32 %v949, %v981
        %v985 = vadd.f32 %v950, %v981
        %v986 = vadd.f32 %v951, %v981
        %v987 = vadd.f32 %v952, %v981
        %v988 = vadd.f32 %v953, %v981
        %v989 = vadd.f32 %v954, %v981
        %v990 = vadd.f32 %v955, %v981
        %v991 = vadd.f32 %v956, %v981
        %v992 = vadd.f32 %v957, %v981
        %v993 = vadd.f32 %v958, %v981
        %v994 = vadd.f32 %v959, %v981
        %v995 = vadd.f32 %v960, %v981
        %v996 = vadd.f32 %v961, %v981
        %v997 = vadd.f32 %v962, %v981
        %v998 = vadd.f32 %v963, %v981
        %v999 = vadd.f32 %v964, %v981
        %v1000 = vadd.f32 %v965, %v981
        %v1001 = vadd.f32 %v966, %v981
        %v1002 = vadd.f32 %v967, %v981
        %v1003 = vadd.f32 %v968, %v981
        %v1004 = vadd.f32 %v969, %v981
        %v1005 = vadd.f32 %v970, %v981
        %v1006 = vadd.f32 %v971, %v981
        %v1007 = vadd.f32 %v972, %v981
        %v1008 = vadd.f32 %v973, %v981
        %v1009 = vadd.f32 %v974, %v981
        %v1010 = vadd.f32 %v975, %v981
        %v1011 = vadd.f32 %v976, %v981
        %v1012 = vadd.f32 %v977, %v981
        %v1013 = vadd.f32 %v978, %v981
        %v1014 = vadd.f32 %v979, %v981
        %v1015 = vpack.c.bf16 %v984, %v983
        %v1016 = vpack.c.bf16 %v986, %v985
        %v1017 = vpack.c.bf16 %v988, %v987
        %v1018 = vpack.c.bf16 %v990, %v989
        %v1019 = vpack.c.bf16 %v992, %v991
        %v1020 = vpack.c.bf16 %v994, %v993
        %v1021 = vpack.c.bf16 %v996, %v995
        %v1022 = vpack.c.bf16 %v998, %v997
        %v1023 = vpack.c.bf16 %v1000, %v999
        %v1024 = vpack.c.bf16 %v1002, %v1001
        %v1025 = vpack.c.bf16 %v1004, %v1003
        %v1026 = vpack.c.bf16 %v1006, %v1005
        %v1027 = vpack.c.bf16 %v1008, %v1007
        %v1028 = vpack.c.bf16 %v1010, %v1009
        %v1029 = vpack.c.bf16 %v1012, %v1011
        %v1030 = vpack.c.bf16 %v1014, %v1013
        %v1031 = vld [vmem:[#allocation5] sm:$0xf]
        %v1032 = vld [vmem:[#allocation5 + $0x4] sm:$0xf]
        %v1033 = vld [vmem:[#allocation5 + $0x8] sm:$0xf]
        %v1034 = vld [vmem:[#allocation5 + $0xc] sm:$0xf]
        %v1035 = vld [vmem:[#allocation5 + $0x10] sm:$0xf]
        %v1036 = vld [vmem:[#allocation5 + $0x14] sm:$0xf]
        %v1037 = vld [vmem:[#allocation5 + $0x18] sm:$0xf]
        %v1038 = vld [vmem:[#allocation5 + $0x1c] sm:$0xf]
        %v1039 = vld [vmem:[#allocation5 + $0x20] sm:$0xf]
        %v1040 = vld [vmem:[#allocation5 + $0x24] sm:$0xf]
        %v1041 = vld [vmem:[#allocation5 + $0x28] sm:$0xf]
        %v1042 = vld [vmem:[#allocation5 + $0x2c] sm:$0xf]
        %v1043 = vld [vmem:[#allocation5 + $0x30] sm:$0xf]
        %v1044 = vld [vmem:[#allocation5 + $0x34] sm:$0xf]
        %v1045 = vld [vmem:[#allocation5 + $0x38] sm:$0xf]
        %v1046 = vld [vmem:[#allocation5 + $0x3c] sm:$0xf]
        %v1063 = vunpack.c.l.b16 %v1031
        %v1064 = vunpack.c.l.b16 %v1032
        %v1065 = vunpack.c.l.b16 %v1033
        %v1066 = vunpack.c.l.b16 %v1034
        %v1067 = vunpack.c.l.b16 %v1035
        %v1068 = vunpack.c.l.b16 %v1036
        %v1069 = vunpack.c.l.b16 %v1037
        %v1070 = vunpack.c.l.b16 %v1038
        %v1071 = vunpack.c.l.b16 %v1039
        %v1072 = vunpack.c.l.b16 %v1040
        %v1073 = vunpack.c.l.b16 %v1041
        %v1074 = vunpack.c.l.b16 %v1042
        %v1075 = vunpack.c.l.b16 %v1043
        %v1076 = vunpack.c.l.b16 %v1044
        %v1077 = vunpack.c.l.b16 %v1045
        %v1078 = vunpack.c.l.b16 %v1046
        %v1079 = vpack.c.b16 %v1064, %v1063
        %v1080 = vpack.c.b16 %v1066, %v1065
        %v1081 = vpack.c.b16 %v1068, %v1067
        %v1082 = vpack.c.b16 %v1070, %v1069
        %v1083 = vpack.c.b16 %v1072, %v1071
        %v1084 = vpack.c.b16 %v1074, %v1073
        %v1085 = vpack.c.b16 %v1076, %v1075
        %v1086 = vpack.c.b16 %v1078, %v1077
        %1095 = vmatpush.bf16.xpose.msra.mxu0 %v1086
        %1096 = vmatpush.bf16.xpose.msra.mxu0 %v1085
        %1097 = vmatpush.bf16.xpose.msra.mxu0 %v1084
        %1098 = vmatpush.bf16.xpose.msra.mxu0 %v1083
        %1099 = vmatpush.bf16.xpose.msra.mxu0 %v1082
        %1100 = vmatpush.bf16.xpose.msra.mxu0 %v1081
        %1101 = vmatpush.bf16.xpose.msra.mxu0 %v1080
        %1102 = vmatpush.bf16.xpose.msra.mxu0 %v1079
        %1103 = vmatmul.bf16.gmra.mxu0 %v1015
        %v1104 = vpop.f32.mrf.mxu0
        %v1105 = vadd.f32 0.0, %v1104
        %v1106 = vpop.f32.mrf.mxu0
        %v1107 = vadd.f32 0.0, %v1106
        %1108 = vmatmul.bf16.gmra.mxu0 %v1016
        %v1109 = vpop.f32.mrf.mxu0
        %v1110 = vadd.f32 0.0, %v1109
        %v1111 = vpop.f32.mrf.mxu0
        %v1112 = vadd.f32 0.0, %v1111
        %1113 = vmatmul.bf16.gmra.mxu0 %v1017
        %v1114 = vpop.f32.mrf.mxu0
        %v1115 = vadd.f32 0.0, %v1114
        %v1116 = vpop.f32.mrf.mxu0
        %v1117 = vadd.f32 0.0, %v1116
        %1118 = vmatmul.bf16.gmra.mxu0 %v1018
        %v1119 = vpop.f32.mrf.mxu0
        %v1120 = vadd.f32 0.0, %v1119
        %v1121 = vpop.f32.mrf.mxu0
        %v1122 = vadd.f32 0.0, %v1121
        %1123 = vmatmul.bf16.gmra.mxu0 %v1019
        %v1124 = vpop.f32.mrf.mxu0
        %v1125 = vadd.f32 0.0, %v1124
        %v1126 = vpop.f32.mrf.mxu0
        %v1127 = vadd.f32 0.0, %v1126
        %1128 = vmatmul.bf16.gmra.mxu0 %v1020
        %v1129 = vpop.f32.mrf.mxu0
        %v1130 = vadd.f32 0.0, %v1129
        %v1131 = vpop.f32.mrf.mxu0
        %v1132 = vadd.f32 0.0, %v1131
        %1133 = vmatmul.bf16.gmra.mxu0 %v1021
        %v1134 = vpop.f32.mrf.mxu0
        %v1135 = vadd.f32 0.0, %v1134
        %v1136 = vpop.f32.mrf.mxu0
        %v1137 = vadd.f32 0.0, %v1136
        %1138 = vmatmul.bf16.gmra.mxu0 %v1022
        %v1139 = vpop.f32.mrf.mxu0
        %v1140 = vadd.f32 0.0, %v1139
        %v1141 = vpop.f32.mrf.mxu0
        %v1142 = vadd.f32 0.0, %v1141
        %1143 = vmatmul.bf16.gmra.mxu0 %v1023
        %v1144 = vpop.f32.mrf.mxu0
        %v1145 = vadd.f32 0.0, %v1144
        %v1146 = vpop.f32.mrf.mxu0
        %v1147 = vadd.f32 0.0, %v1146
        %1148 = vmatmul.bf16.gmra.mxu0 %v1024
        %v1149 = vpop.f32.mrf.mxu0
        %v1150 = vadd.f32 0.0, %v1149
        %v1151 = vpop.f32.mrf.mxu0
        %v1152 = vadd.f32 0.0, %v1151
        %1153 = vmatmul.bf16.gmra.mxu0 %v1025
        %v1154 = vpop.f32.mrf.mxu0
        %v1155 = vadd.f32 0.0, %v1154
        %v1156 = vpop.f32.mrf.mxu0
        %v1157 = vadd.f32 0.0, %v1156
        %1158 = vmatmul.bf16.gmra.mxu0 %v1026
        %v1159 = vpop.f32.mrf.mxu0
        %v1160 = vadd.f32 0.0, %v1159
        %v1161 = vpop.f32.mrf.mxu0
        %v1162 = vadd.f32 0.0, %v1161
        %1163 = vmatmul.bf16.gmra.mxu0 %v1027
        %v1164 = vpop.f32.mrf.mxu0
        %v1165 = vadd.f32 0.0, %v1164
        %v1166 = vpop.f32.mrf.mxu0
        %v1167 = vadd.f32 0.0, %v1166
        %1168 = vmatmul.bf16.gmra.mxu0 %v1028
        %v1169 = vpop.f32.mrf.mxu0
        %v1170 = vadd.f32 0.0, %v1169
        %v1171 = vpop.f32.mrf.mxu0
        %v1172 = vadd.f32 0.0, %v1171
        %1173 = vmatmul.bf16.gmra.mxu0 %v1029
        %v1174 = vpop.f32.mrf.mxu0
        %v1175 = vadd.f32 0.0, %v1174
        %v1176 = vpop.f32.mrf.mxu0
        %v1177 = vadd.f32 0.0, %v1176
        %1178 = vmatmul.bf16.gmra.mxu0 %v1030
        %v1179 = vpop.f32.mrf.mxu0
        %v1180 = vadd.f32 0.0, %v1179
        %v1181 = vpop.f32.mrf.mxu0
        %v1182 = vadd.f32 0.0, %v1181
        %1183 = vdwg.mxu0
        %v1184 = vadd.f32 %v264, %v1105
        %v1185 = vadd.f32 %v265, %v1107
        %v1186 = vadd.f32 %v266, %v1110
        %v1187 = vadd.f32 %v267, %v1112
        %v1188 = vadd.f32 %v268, %v1115
        %v1189 = vadd.f32 %v269, %v1117
        %v1190 = vadd.f32 %v270, %v1120
        %v1191 = vadd.f32 %v271, %v1122
        %v1192 = vadd.f32 %v272, %v1125
        %v1193 = vadd.f32 %v273, %v1127
        %v1194 = vadd.f32 %v274, %v1130
        %v1195 = vadd.f32 %v275, %v1132
        %v1196 = vadd.f32 %v276, %v1135
        %v1197 = vadd.f32 %v277, %v1137
        %v1198 = vadd.f32 %v278, %v1140
        %v1199 = vadd.f32 %v279, %v1142
        %v1200 = vadd.f32 %v280, %v1145
        %v1201 = vadd.f32 %v281, %v1147
        %v1202 = vadd.f32 %v282, %v1150
        %v1203 = vadd.f32 %v283, %v1152
        %v1204 = vadd.f32 %v284, %v1155
        %v1205 = vadd.f32 %v285, %v1157
        %v1206 = vadd.f32 %v286, %v1160
        %v1207 = vadd.f32 %v287, %v1162
        %v1208 = vadd.f32 %v288, %v1165
        %v1209 = vadd.f32 %v289, %v1167
        %v1210 = vadd.f32 %v290, %v1170
        %v1211 = vadd.f32 %v291, %v1172
        %v1212 = vadd.f32 %v292, %v1175
        %v1213 = vadd.f32 %v293, %v1177
        %v1214 = vadd.f32 %v294, %v1180
        %v1215 = vadd.f32 %v295, %v1182
        %v1216 = vld [vmem:[%s2] sm:$0x1]
        %v1218 = vperm.slane %v1216, 0
        %v1220 = vadd.f32 %v1184, %v1218
        %v1221 = vadd.f32 %v1185, %v1218
        %v1222 = vadd.f32 %v1186, %v1218
        %v1223 = vadd.f32 %v1187, %v1218
        %v1224 = vadd.f32 %v1188, %v1218
        %v1225 = vadd.f32 %v1189, %v1218
        %v1226 = vadd.f32 %v1190, %v1218
        %v1227 = vadd.f32 %v1191, %v1218
        %v1228 = vadd.f32 %v1192, %v1218
        %v1229 = vadd.f32 %v1193, %v1218
        %v1230 = vadd.f32 %v1194, %v1218
        %v1231 = vadd.f32 %v1195, %v1218
        %v1232 = vadd.f32 %v1196, %v1218
        %v1233 = vadd.f32 %v1197, %v1218
        %v1234 = vadd.f32 %v1198, %v1218
        %v1235 = vadd.f32 %v1199, %v1218
        %v1236 = vadd.f32 %v1200, %v1218
        %v1237 = vadd.f32 %v1201, %v1218
        %v1238 = vadd.f32 %v1202, %v1218
        %v1239 = vadd.f32 %v1203, %v1218
        %v1240 = vadd.f32 %v1204, %v1218
        %v1241 = vadd.f32 %v1205, %v1218
        %v1242 = vadd.f32 %v1206, %v1218
        %v1243 = vadd.f32 %v1207, %v1218
        %v1244 = vadd.f32 %v1208, %v1218
        %v1245 = vadd.f32 %v1209, %v1218
        %v1246 = vadd.f32 %v1210, %v1218
        %v1247 = vadd.f32 %v1211, %v1218
        %v1248 = vadd.f32 %v1212, %v1218
        %v1249 = vadd.f32 %v1213, %v1218
        %v1250 = vadd.f32 %v1214, %v1218
        %v1251 = vadd.f32 %v1215, %v1218
        %1252 = vst [vmem:[%s261] sm:$0xff] %v1220
        %1253 = vst [vmem:[%s261 + $0x8] sm:$0xff] %v1221
        %1254 = vst [vmem:[%s261 + $0x10] sm:$0xff] %v1222
        %1255 = vst [vmem:[%s261 + $0x18] sm:$0xff] %v1223
        %1256 = vst [vmem:[%s261 + $0x20] sm:$0xff] %v1224
        %1257 = vst [vmem:[%s261 + $0x28] sm:$0xff] %v1225
        %1258 = vst [vmem:[%s261 + $0x30] sm:$0xff] %v1226
        %1259 = vst [vmem:[%s261 + $0x38] sm:$0xff] %v1227
        %1260 = vst [vmem:[%s261 + $0x40] sm:$0xff] %v1228
        %1261 = vst [vmem:[%s261 + $0x48] sm:$0xff] %v1229
        %1262 = vst [vmem:[%s261 + $0x50] sm:$0xff] %v1230
        %1263 = vst [vmem:[%s261 + $0x58] sm:$0xff] %v1231
        %1264 = vst [vmem:[%s261 + $0x60] sm:$0xff] %v1232
        %1265 = vst [vmem:[%s261 + $0x68] sm:$0xff] %v1233
        %1266 = vst [vmem:[%s261 + $0x70] sm:$0xff] %v1234
        %1267 = vst [vmem:[%s261 + $0x78] sm:$0xff] %v1235
        %1268 = vst [vmem:[%s261 + $0x80] sm:$0xff] %v1236
        %1269 = vst [vmem:[%s261 + $0x88] sm:$0xff] %v1237
        %1270 = vst [vmem:[%s261 + $0x90] sm:$0xff] %v1238
        %1271 = vst [vmem:[%s261 + $0x98] sm:$0xff] %v1239
        %1272 = vst [vmem:[%s261 + $0xa0] sm:$0xff] %v1240
        %1273 = vst [vmem:[%s261 + $0xa8] sm:$0xff] %v1241
        %1274 = vst [vmem:[%s261 + $0xb0] sm:$0xff] %v1242
        %1275 = vst [vmem:[%s261 + $0xb8] sm:$0xff] %v1243
        %1276 = vst [vmem:[%s261 + $0xc0] sm:$0xff] %v1244
        %1277 = vst [vmem:[%s261 + $0xc8] sm:$0xff] %v1245
        %1278 = vst [vmem:[%s261 + $0xd0] sm:$0xff] %v1246
        %1279 = vst [vmem:[%s261 + $0xd8] sm:$0xff] %v1247
        %1280 = vst [vmem:[%s261 + $0xe0] sm:$0xff] %v1248
        %1281 = vst [vmem:[%s261 + $0xe8] sm:$0xff] %v1249
        %1282 = vst [vmem:[%s261 + $0xf0] sm:$0xff] %v1250
        %1283 = vst [vmem:[%s261 + $0xf8] sm:$0xff] %v1251
        %s1284 = sand.u32 %s141, 1
        %s1285 = scalar_lea.sflag [#allocation4], %s1284
        %s1286 = sand.u32 %s141, 1
        %s1287 = smul.addr %s1286, 256
        %s1288 = scalar_lea.vmem [#allocation7], %s1287
        // Predicated region
        $region49: #{tpu_custom_call.1} parent=39 // pred_check
          %p1289 = pneg %p151
        $region50: #{tpu_custom_call.1} parent=39 // pred_check_branch
          %1291 = sbr.rel (%p1289) target = $region52
        $region51: #{tpu_custom_call.1} parent=39 // pred_region
          %s1292 = smul.u32 32, %s23
          %1294 = vsyncadd %s1285, 0
          %s1295 = smul.addr %s1292, 8
          %s1296 = scalar_lea.hbm %s5, %s1295
          %s1297 = sshll.u32 %s1288, 4
          %s1298 = int_to_ptr.vmem [resolvable:$true] %s1297
          %s1299 = sshll.u32 %s1296, 4
          %s1300 = int_to_ptr.hbm [resolvable:$true] %s1299
          %1305 = dma.vmem_to_hbm [thread:$0]  %s1298, 4096, %s1300, %s1285, 128, 128, 8
        $region52: #{tpu_custom_call.1} parent=39 // pred_fallthru
          _
      $region40: #{tpu_custom_call.1} parent=5 // pred_fallthru
        _
      %p1306 = scmp.le.s32.totalorder 2, %s18
      // Predicated region
      $region53: #{tpu_custom_call.1} parent=5 // pred_check
        %p1307 = pneg %p1306
      $region54: #{tpu_custom_call.1} parent=5 // pred_check_branch
        %1309 = sbr.rel (%p1307) target = $region56
      $region55: #{tpu_custom_call.1} parent=5 // pred_region
        %s1310 = ssub.s32 %s18, 2
        // Predicated region
        $region57: #{tpu_custom_call.1} parent=55 // pred_check
          %p1311 = pneg %p157
        $region58: #{tpu_custom_call.1} parent=55 // pred_check_branch
          %1313 = sbr.rel (%p1311) target = $region60
        $region59: #{tpu_custom_call.1} parent=55 // pred_region
          %s1314 = sand.u32 %s142, 1
          %s1315 = scalar_lea.sflag [#allocation4], %s1314
          %s1316 = sand.u32 %s142, 1
          %s1317 = smul.addr %s1316, 256
          %s1318 = scalar_lea.vmem [#allocation7], %s1317
          %1320 = dma.done %s1315, 4096
        $region60: #{tpu_custom_call.1} parent=55 // pred_fallthru
          _
      $region56: #{tpu_custom_call.1} parent=5 // pred_fallthru
        _
    $region6: #{tpu_custom_call.1} parent=1 // loop_footer
      %s22 = sadd.s32 1, %s18
    $region7: #{tpu_custom_call.1} parent=1 // loop_footer_branch
      %17 = sbr.rel target = $region3
    $region8: #{tpu_custom_call.1} parent=1 // loop_exit
      _
    %1321 = vsyncpa [#allocation3], 1
    %s1322 = scalar_lea.sflag [#allocation3], 1
    %1323 = vsyncpa %s1322, 1
    %1324 = vsyncpa [#allocation6], 1
    %1325 = vsyncpa [#allocation4], 1
    %s1326 = scalar_lea.sflag [#allocation4], 1
    %1327 = vsyncpa %s1326, 1

</llo_original>
